<compile_context>
chip_gen: v6e
topology: v6e:2x2x1
jax: 0.10.0
libtpu: 0.0.40
codegen_flags: <defaults>
</compile_context>

<pallas_src>
import functools

import jax
import jax.numpy as jnp
from jax.experimental import pallas as pl
from jax.experimental.pallas import tpu as pltpu

_LANE = 128  # vreg lane width
_SUB = 8     # vreg sublane width


def _round_up(n, m):
    return ((n + m - 1) // m) * m


def ffnn_kernel(x_ref, w1_ref, b1_ref, w2_ref, b2_ref, out_ref):
    # Hidden layer: h = relu(x @ W1 + b1).
    # x / W1 arrive pre-cast to bf16 (MXU inputs); accumulate in f32; f32 bias.
    h = jnp.dot(x_ref[...], w1_ref[...],
                preferred_element_type=jnp.float32) + b1_ref[...]
    h = jnp.maximum(h, 0.0)

    # Output layer: z = h @ W2 + b2.  Padded output columns carry a -1e30 f32
    # bias so exp() of them is ~0 in the softmax denominator (mask-via-bias).
    z = jnp.dot(h.astype(jnp.bfloat16), w2_ref[...],
                preferred_element_type=jnp.float32) + b2_ref[...]

    # Numerically stable log-softmax along the lane-dense (padded) last dim.
    z_max = jnp.max(z, axis=-1, keepdims=True)
    z_shift = z - z_max
    lse = jnp.log(jnp.sum(jnp.exp(z_shift), axis=-1, keepdims=True))
    out_ref[...] = (z_shift - lse).astype(out_ref.dtype)


def prepare_ffnn_params(w1, b1, w2, b2):
    """Pad params to lane-dense shapes and pre-cast weights to bf16.

    Call ONCE at model init (hoisted out of the per-forward path).
    w1: [D, H], b1: [H]/[1,H], w2: [H, O], b2: [O]/[1,O].
    """
    D, H = w1.shape
    O = w2.shape[1]
    D_pad = _round_up(D, _LANE)
    H_pad = _round_up(H, _LANE)
    O_pad = _round_up(O, _LANE)

    b1 = jnp.asarray(b1, jnp.float32).reshape(1, H)
    b2 = jnp.asarray(b2, jnp.float32).reshape(1, O)

    # bf16 weights: halves HBM->VMEM DMA and VMEM residency, no in-kernel cast.
    w1p = jnp.zeros((D_pad, H_pad), jnp.bfloat16).at[:D, :H].set(
        jnp.asarray(w1, jnp.float32).astype(jnp.bfloat16))
    w2p = jnp.zeros((H_pad, O_pad), jnp.bfloat16).at[:H, :O].set(
        jnp.asarray(w2, jnp.float32).astype(jnp.bfloat16))
    # Biases stay f32 (added after f32 accumulation inside the kernel).
    b1p = jnp.zeros((1, H_pad), jnp.float32).at[:, :H].set(b1)
    # Huge negative bias on padded logit columns -> they drop out of the softmax.
    b2p = jnp.full((1, O_pad), -1e30, jnp.float32).at[:, :O].set(b2)
    return w1p, b1p, w2p, b2p


@functools.partial(jax.jit, static_argnames=("out_dim", "block_b"))
def ffnn_forward(x, w1p, b1p, w2p, b2p, *, out_dim, block_b=512):
    """x: [B, D]; padded bf16/f32 params from prepare_ffnn_params -> [B, out_dim] f32."""
    B, D = x.shape
    D_pad, H_pad = w1p.shape
    O_pad = w2p.shape[1]
    assert D <= D_pad and out_dim <= O_pad

    # Batch tile: multiple of 8 sublanes.  If the whole batch would fit in one
    # block but spans >= 2 sublane groups, split it so the "parallel" batch
    # axis has >= 2 blocks (both v7x TensorCores get work).
    TB = max(_SUB, min(_round_up(block_b, _SUB), _round_up(B, _SUB)))
    if _round_up(B, _SUB) >= 2 * _SUB and _round_up(B, TB) // TB < 2:
        TB = _round_up(-(-B // 2), _SUB)
    B_pad = _round_up(B, TB)
    n_blocks = B_pad // TB

    # x streamed in bf16: halves the dominant per-step HBM->VMEM traffic and
    # the x double-buffer footprint.
    xp = jnp.zeros((B_pad, D_pad), jnp.bfloat16).at[:B, :D].set(
        x.astype(jnp.bfloat16))

    # VMEM budget: single-buffered bf16 weights + f32 biases (resident),
    # double-buffered bf16 x tile + f32 out tile, f32 intermediates, headroom.
    resident = (D_pad * H_pad + H_pad * O_pad) * 2 + (H_pad + O_pad) * 4
    per_step = (2 * TB * D_pad * 2            # x double buffer (bf16)
                + 2 * TB * O_pad * 4          # out double buffer (f32)
                + TB * (H_pad + O_pad) * 4)   # f32 intermediates h, z
    vmem_limit = min(max(resident + per_step + (8 << 20), 32 << 20), 64 << 20)

    cost = pl.CostEstimate(
        flops=2 * B_pad * (D_pad * H_pad + H_pad * O_pad),
        transcendentals=B_pad * (O_pad + 1),
        bytes_accessed=(B_pad * D_pad * 2 + resident + B_pad * O_pad * 4),
    )

    out = pl.pallas_call(
        ffnn_kernel,
        out_shape=jax.ShapeDtypeStruct((B_pad, O_pad), jnp.float32),
        grid_spec=pltpu.PrefetchScalarGridSpec(
            num_scalar_prefetch=0,
            grid=(n_blocks,),
            in_specs=[
                # x tiled over the batch (pipelined / double-buffered).
                pl.BlockSpec((TB, D_pad), lambda i: (i, 0)),
                # Weights & biases: constant index_map -> VMEM-resident across
                # steps; single-buffered (a second pipeline buffer would be
                # pure wasted VMEM since the block never changes).
                pl.BlockSpec((D_pad, H_pad), lambda i: (0, 0),
                             pipeline_mode=pl.Buffered(1)),
                pl.BlockSpec((1, H_pad), lambda i: (0, 0),
                             pipeline_mode=pl.Buffered(1)),
                pl.BlockSpec((H_pad, O_pad), lambda i: (0, 0),
                             pipeline_mode=pl.Buffered(1)),
                pl.BlockSpec((1, O_pad), lambda i: (0, 0),
                             pipeline_mode=pl.Buffered(1)),
            ],
            # Lane-dense output slab (O padded to 128) -> unmasked vector stores.
            # TODO(synk): on v5e consider a bf16 out dtype (halves the single
            # vst-slot stream) if downstream loss tolerates ~3 sig. digits.
            out_specs=pl.BlockSpec((TB, O_pad), lambda i: (i, 0)),
        ),
        compiler_params=pltpu.CompilerParams(
            # Independent batch axis: shardable across v7x's two TensorCores.
            dimension_semantics=("parallel",),
            vmem_limit_bytes=vmem_limit,
        ),
        cost_estimate=cost,
    )(xp, w1p, b1p, w2p, b2p)

    # Strip batch / class padding.
    return out[:B, :out_dim]


if __name__ == "__main__":
    # Small shapes consistent with the module: batch=8, input_dim=32, h=32, output_dim=5
    B, D, H, O = 8, 32, 32, 5

    key = jax.random.PRNGKey(0)
    kx, k1, kb1, k2, kb2 = jax.random.split(key, 5)

    # Deterministic init (mimics nn.Linear uniform(-1/sqrt(fan_in), 1/sqrt(fan_in)))
    bound1 = 1.0 / jnp.sqrt(D)
    bound2 = 1.0 / jnp.sqrt(H)
    x = jax.random.normal(kx, (B, D), dtype=jnp.float32)
    w1 = jax.random.uniform(k1, (D, H), minval=-bound1, maxval=bound1, dtype=jnp.float32)
    b1 = jax.random.uniform(kb1, (1, H), minval=-bound1, maxval=bound1, dtype=jnp.float32)
    w2 = jax.random.uniform(k2, (H, O), minval=-bound2, maxval=bound2, dtype=jnp.float32)
    b2 = jax.random.uniform(kb2, (1, O), minval=-bound2, maxval=bound2, dtype=jnp.float32)

    # One-time param preparation (padding + bf16 cast), hoisted out of forward.
    w1p, b1p, w2p, b2p = prepare_ffnn_params(w1, b1, w2, b2)

    out = ffnn_forward(x, w1p, b1p, w2p, b2p, out_dim=O)
    jax.block_until_ready(out)

    # Pure-JAX reference with the same bf16-matmul / f32-accumulate recipe.
    h_ref = jnp.maximum(
        jnp.dot(x.astype(jnp.bfloat16), w1.astype(jnp.bfloat16),
                preferred_element_type=jnp.float32) + b1, 0.0)
    z_ref = jnp.dot(h_ref.astype(jnp.bfloat16), w2.astype(jnp.bfloat16),
                    preferred_element_type=jnp.float32) + b2
    ref = jax.nn.log_softmax(z_ref, axis=-1)
    assert out.shape == (B, O), f"bad output shape {out.shape}"
    assert jnp.allclose(out, ref, atol=1e-4, rtol=1e-4), "mismatch vs reference"

    # Sanity vs full-f32 reference (looser tolerance due to bf16 matmul inputs).
    ref_f32 = jax.nn.log_softmax(jnp.maximum(x @ w1 + b1, 0.0) @ w2 + b2, axis=-1)
    assert jnp.allclose(out, ref_f32, atol=5e-2, rtol=5e-2), "mismatch vs f32 reference"

    print("KERNEL_OK")
</pallas_src>

<mosaic_0001>
module attributes {stable_mosaic.version = 11 : i64} {
  func.func @ffnn_kernel(%arg0: i32, %arg1: memref<8x128xbf16, #tpu.memory_space<vmem>>, %arg2: memref<128x128xbf16, #tpu.memory_space<vmem>>, %arg3: memref<1x128xf32, #tpu.memory_space<vmem>>, %arg4: memref<128x128xbf16, #tpu.memory_space<vmem>>, %arg5: memref<1x128xf32, #tpu.memory_space<vmem>>, %arg6: memref<8x128xf32, #tpu.memory_space<vmem>>) attributes {dimension_semantics = [#tpu.dimension_semantics<parallel>], iteration_bounds = array<i64: 1>, scalar_prefetch = 0 : i64, scratch_operands = 0 : i64, tpu.core_type = #tpu.core_type<tc>, window_params = [{transform_indices = @transform_0, window_bounds = array<i64: 8, 128>}, {pipeline_mode = #tpu.pipeline_mode<synchronous>, transform_indices = @transform_1, window_bounds = array<i64: 128, 128>}, {pipeline_mode = #tpu.pipeline_mode<synchronous>, transform_indices = @transform_2, window_bounds = array<i64: 1, 128>}, {pipeline_mode = #tpu.pipeline_mode<synchronous>, transform_indices = @transform_3, window_bounds = array<i64: 128, 128>}, {pipeline_mode = #tpu.pipeline_mode<synchronous>, transform_indices = @transform_4, window_bounds = array<i64: 1, 128>}, {transform_indices = @transform_5, window_bounds = array<i64: 8, 128>}]} {
    %c0 = arith.constant 0 : index
    %c0_0 = arith.constant 0 : index
    %0 = vector.load %arg1[%c0, %c0_0] : memref<8x128xbf16, #tpu.memory_space<vmem>>, vector<8x128xbf16>
    %c0_1 = arith.constant 0 : index
    %c0_2 = arith.constant 0 : index
    %1 = vector.load %arg2[%c0_1, %c0_2] : memref<128x128xbf16, #tpu.memory_space<vmem>>, vector<128x128xbf16>
    %cst = arith.constant dense<0.000000e+00> : vector<8x128xf32>
    %2 = tpu.matmul %0, %1, %cst {dimension_numbers = #tpu.dot_dimension_numbers<[1], [0], [0], [1], [0, 0, 1, 1], [], []>} : vector<8x128xbf16>, vector<128x128xbf16>, vector<8x128xf32> -> vector<8x128xf32>
    %c0_3 = arith.constant 0 : index
    %c0_4 = arith.constant 0 : index
    %3 = vector.load %arg3[%c0_3, %c0_4] : memref<1x128xf32, #tpu.memory_space<vmem>>, vector<1x128xf32>
    %4 = vector.broadcast %3 : vector<1x128xf32> to vector<8x128xf32>
    %5 = arith.addf %2, %4 : vector<8x128xf32>
    %cst_5 = arith.constant 0.000000e+00 : f32
    %6 = vector.broadcast %cst_5 : f32 to vector<8x128xf32>
    %7 = arith.maximumf %5, %6 : vector<8x128xf32>
    %8 = arith.truncf %7 : vector<8x128xf32> to vector<8x128xbf16>
    %c0_6 = arith.constant 0 : index
    %c0_7 = arith.constant 0 : index
    %9 = vector.load %arg4[%c0_6, %c0_7] : memref<128x128xbf16, #tpu.memory_space<vmem>>, vector<128x128xbf16>
    %cst_8 = arith.constant dense<0.000000e+00> : vector<8x128xf32>
    %10 = tpu.matmul %8, %9, %cst_8 {dimension_numbers = #tpu.dot_dimension_numbers<[1], [0], [0], [1], [0, 0, 1, 1], [], []>} : vector<8x128xbf16>, vector<128x128xbf16>, vector<8x128xf32> -> vector<8x128xf32>
    %c0_9 = arith.constant 0 : index
    %c0_10 = arith.constant 0 : index
    %11 = vector.load %arg5[%c0_9, %c0_10] : memref<1x128xf32, #tpu.memory_space<vmem>>, vector<1x128xf32>
    %12 = vector.broadcast %11 : vector<1x128xf32> to vector<8x128xf32>
    %13 = arith.addf %10, %12 : vector<8x128xf32>
    %cst_11 = arith.constant dense<0xFF800000> : vector<8xf32>
    %14 = vector.multi_reduction <maximumf>, %13, %cst_11 [1] : vector<8x128xf32> to vector<8xf32>
    %15 = vector.shape_cast %14 : vector<8xf32> to vector<8x1xf32>
    %16 = vector.broadcast %15 : vector<8x1xf32> to vector<8x128xf32>
    %17 = arith.subf %13, %16 : vector<8x128xf32>
    %18 = math.exp %17 : vector<8x128xf32>
    %cst_12 = arith.constant dense<0.000000e+00> : vector<8xf32>
    %19 = vector.multi_reduction <add>, %18, %cst_12 [1] : vector<8x128xf32> to vector<8xf32>
    %20 = vector.shape_cast %19 : vector<8xf32> to vector<8x1xf32>
    %21 = math.log %20 : vector<8x1xf32>
    %22 = vector.broadcast %21 : vector<8x1xf32> to vector<8x128xf32>
    %23 = arith.subf %17, %22 : vector<8x128xf32>
    %c0_13 = arith.constant 0 : index
    %c0_14 = arith.constant 0 : index
    %24 = vector.load %arg6[%c0_13, %c0_14] : memref<8x128xf32, #tpu.memory_space<vmem>>, vector<8x128xf32>
    tpu.vector_store %arg6[%c0_13, %c0_14], %23 {strides = array<i32>} : memref<8x128xf32, #tpu.memory_space<vmem>>, vector<8x128xf32>,
    return
  }
  func.func @transform_0(%arg0: i32) -> (i32, i32) {
    %c0_i32 = arith.constant 0 : i32
    %c0_i32_0 = arith.constant 0 : i32
    return %arg0, %c0_i32 : i32, i32
  }
  func.func @transform_1(%arg0: i32) -> (i32, i32) {
    %c0_i32 = arith.constant 0 : i32
    %c0_i32_0 = arith.constant 0 : i32
    %c0_i32_1 = arith.constant 0 : i32
    return %c0_i32, %c0_i32_0 : i32, i32
  }
  func.func @transform_2(%arg0: i32) -> (i32, i32) {
    %c0_i32 = arith.constant 0 : i32
    %c0_i32_0 = arith.constant 0 : i32
    %c0_i32_1 = arith.constant 0 : i32
    return %c0_i32, %c0_i32_0 : i32, i32
  }
  func.func @transform_3(%arg0: i32) -> (i32, i32) {
    %c0_i32 = arith.constant 0 : i32
    %c0_i32_0 = arith.constant 0 : i32
    %c0_i32_1 = arith.constant 0 : i32
    return %c0_i32, %c0_i32_0 : i32, i32
  }
  func.func @transform_4(%arg0: i32) -> (i32, i32) {
    %c0_i32 = arith.constant 0 : i32
    %c0_i32_0 = arith.constant 0 : i32
    %c0_i32_1 = arith.constant 0 : i32
    return %c0_i32, %c0_i32_0 : i32, i32
  }
  func.func @transform_5(%arg0: i32) -> (i32, i32) {
    %c0_i32 = arith.constant 0 : i32
    %c0_i32_0 = arith.constant 0 : i32
    return %arg0, %c0_i32 : i32, i32
  }
}

</mosaic_0001>

<llo_original>
// kernel: ffnn_forward.1
$region0: #{ffnn_forward.1}
  #allocation0 [shape = 'u32[]', space=smem, size = 0x4, offset = 0x4, fixed_abs, tag = 'smem constant byte address 0x4 - core index']
  #allocation1 [shape = 'u32[144,128]{1,0:T(1,128)}', space=vmem, size = 0x12000, scoped, tag = 'internal scratch']
  %s0 = inlined_call_operand.vmem [shape: bf16[8,128], index: 0, kind: input, shape index: {}]
  %s1 = inlined_call_operand.hbm [shape: bf16[128,128], index: 1, kind: input, shape index: {}]
  %s2 = inlined_call_operand.vmem [shape: f32[1,128], index: 2, kind: input, shape index: {}]
  %s3 = inlined_call_operand.hbm [shape: bf16[128,128], index: 3, kind: input, shape index: {}]
  %s4 = inlined_call_operand.vmem [shape: f32[1,128], index: 4, kind: input, shape index: {}]
  %s5 = inlined_call_operand.hbm [shape: f32[8,128], index: 5, kind: output, shape index: {}]
  %s6 = sld [smem:[#allocation0]]
  $region38: #{ffnn_forward.1} parent=0
    _
  %s8 = ssub.s32 1, %s6
  %s9 = scalar_select 0, %s8, %s6
  $region1: #{ffnn_forward.1} parent=0
    #allocation2 [shape = 'u8[32768]{0}', space=vmem, size = 0x8000, scoped, tag = 'input window, operand 1, single buffered']
    #allocation3 [shape = 's32[1]{0}', space=sflag, size = 0x4, scoped, tag = 'scoped memory for ffnn_forward.1']
    #allocation4 [shape = 's32[1]{0}', space=sflag, size = 0x4, scoped, tag = 'scoped memory for ffnn_forward.1']
    #allocation5 [shape = 'u8[32768]{0}', space=vmem, size = 0x8000, scoped, tag = 'input window, operand 3, single buffered']
    #allocation6 [shape = 's32[1]{0}', space=sflag, size = 0x4, scoped, tag = 'scoped memory for ffnn_forward.1']
    #allocation7 [shape = 'u8[4096]{0}', space=vmem, size = 0x1000, scoped, tag = 'output window, operand 0, single buffered']
    %10 = vsyncpa [#allocation3], 0
    %11 = vsyncpa [#allocation6], 0
    %12 = vsyncpa [#allocation4], 0
    // Predicated region
    $region2: #{ffnn_forward.1} parent=1 // pred_check
      _
    $region3: #{ffnn_forward.1} parent=1 // pred_check_branch
      %14 = sbr.rel (0) target = $region5
    $region4: #{ffnn_forward.1} parent=1 // pred_region
      _
    $region5: #{ffnn_forward.1} parent=1 // pred_fallthru
      _
    // Predicated region
    $region6: #{ffnn_forward.1} parent=1 // pred_check
      _
    $region7: #{ffnn_forward.1} parent=1 // pred_check_branch
      %16 = sbr.rel (0) target = $region9
    $region8: #{ffnn_forward.1} parent=1 // pred_region
      %s18 = ssub.s32 1024, 1024
      %19 = vsyncadd [#allocation3], %s18
      %s20 = sshll.u32 [#allocation2], 4
      %s21 = int_to_ptr.vmem [resolvable:$true] %s20
      %26 = dma.hbm_to_vmem [thread:$0]  %s1, 1024, %s21, [#allocation3], 64, 64, 4
    $region9: #{ffnn_forward.1} parent=1 // pred_fallthru
      _
    // Predicated region
    $region10: #{ffnn_forward.1} parent=1 // pred_check
      _
    $region11: #{ffnn_forward.1} parent=1 // pred_check_branch
      %28 = sbr.rel (0) target = $region13
    $region12: #{ffnn_forward.1} parent=1 // pred_region
      _
    $region13: #{ffnn_forward.1} parent=1 // pred_fallthru
      _
    // Predicated region
    $region14: #{ffnn_forward.1} parent=1 // pred_check
      _
    $region15: #{ffnn_forward.1} parent=1 // pred_check_branch
      %30 = sbr.rel (0) target = $region17
    $region16: #{ffnn_forward.1} parent=1 // pred_region
      %s32 = ssub.s32 1024, 1024
      %33 = vsyncadd [#allocation6], %s32
      %s34 = sshll.u32 [#allocation5], 4
      %s35 = int_to_ptr.vmem [resolvable:$true] %s34
      %40 = dma.hbm_to_vmem [thread:$0]  %s3, 1024, %s35, [#allocation6], 64, 64, 4
    $region17: #{ffnn_forward.1} parent=1 // pred_fallthru
      _
    // Predicated region
    $region18: #{ffnn_forward.1} parent=1 // pred_check
      _
    $region19: #{ffnn_forward.1} parent=1 // pred_check_branch
      %42 = sbr.rel (0) target = $region21
    $region20: #{ffnn_forward.1} parent=1 // pred_region
      _
    $region21: #{ffnn_forward.1} parent=1 // pred_fallthru
      _
    // Predicated region
    $region22: #{ffnn_forward.1} parent=1 // pred_check
      _
    $region23: #{ffnn_forward.1} parent=1 // pred_check_branch
      %44 = sbr.rel (0) target = $region25
    $region24: #{ffnn_forward.1} parent=1 // pred_region
      %45 = dma.done [#allocation3], 1024
    $region25: #{ffnn_forward.1} parent=1 // pred_fallthru
      _
    // Predicated region
    $region26: #{ffnn_forward.1} parent=1 // pred_check
      _
    $region27: #{ffnn_forward.1} parent=1 // pred_check_branch
      %47 = sbr.rel (0) target = $region29
    $region28: #{ffnn_forward.1} parent=1 // pred_region
      %48 = dma.done [#allocation6], 1024
    $region29: #{ffnn_forward.1} parent=1 // pred_fallthru
      _
    %v50 = vld [vmem:[%s0] sm:$0xf]
    %v51 = vld [vmem:[#allocation2] sm:$0xf]
    %v52 = vld [vmem:[#allocation2 + $0x4] sm:$0xf]
    %v53 = vld [vmem:[#allocation2 + $0x8] sm:$0xf]
    %v54 = vld [vmem:[#allocation2 + $0xc] sm:$0xf]
    %v55 = vld [vmem:[#allocation2 + $0x10] sm:$0xf]
    %v56 = vld [vmem:[#allocation2 + $0x14] sm:$0xf]
    %v57 = vld [vmem:[#allocation2 + $0x18] sm:$0xf]
    %v58 = vld [vmem:[#allocation2 + $0x1c] sm:$0xf]
    %v59 = vld [vmem:[#allocation2 + $0x20] sm:$0xf]
    %v60 = vld [vmem:[#allocation2 + $0x24] sm:$0xf]
    %v61 = vld [vmem:[#allocation2 + $0x28] sm:$0xf]
    %v62 = vld [vmem:[#allocation2 + $0x2c] sm:$0xf]
    %v63 = vld [vmem:[#allocation2 + $0x30] sm:$0xf]
    %v64 = vld [vmem:[#allocation2 + $0x34] sm:$0xf]
    %v65 = vld [vmem:[#allocation2 + $0x38] sm:$0xf]
    %v66 = vld [vmem:[#allocation2 + $0x3c] sm:$0xf]
    %v67 = vld [vmem:[%s2] sm:$0x1]
    %v69 = vlaneseq
    %v70 = vshrl.u32 %v69, 7
    %v71 = vsub.s32 0, %v70
    %v72 = vrot.slane %v67, %v71
    %v90 = vunpack.c.l.b16 %v51
    %v91 = vunpack.c.l.b16 %v52
    %v92 = vunpack.c.l.b16 %v53
    %v93 = vunpack.c.l.b16 %v54
    %v94 = vunpack.c.l.b16 %v55
    %v95 = vunpack.c.l.b16 %v56
    %v96 = vunpack.c.l.b16 %v57
    %v97 = vunpack.c.l.b16 %v58
    %v98 = vunpack.c.l.b16 %v59
    %v99 = vunpack.c.l.b16 %v60
    %v100 = vunpack.c.l.b16 %v61
    %v101 = vunpack.c.l.b16 %v62
    %v102 = vunpack.c.l.b16 %v63
    %v103 = vunpack.c.l.b16 %v64
    %v104 = vunpack.c.l.b16 %v65
    %v105 = vunpack.c.l.b16 %v66
    %v106 = vpack.c.b16 %v91, %v90
    %v107 = vpack.c.b16 %v93, %v92
    %v108 = vpack.c.b16 %v95, %v94
    %v109 = vpack.c.b16 %v97, %v96
    %v110 = vpack.c.b16 %v99, %v98
    %v111 = vpack.c.b16 %v101, %v100
    %v112 = vpack.c.b16 %v103, %v102
    %v113 = vpack.c.b16 %v105, %v104
    %122 = vmatprep.subr.bf16.mxu0 0
    %123 = vmatpush1.bf16.msra.mxu0 %v113
    %124 = vmatprep.subr.bf16.mxu0 0
    %125 = vmatpush1.bf16.msra.mxu0 %v112
    %126 = vmatprep.subr.bf16.mxu0 0
    %127 = vmatpush1.bf16.msra.mxu0 %v111
    %128 = vmatprep.subr.bf16.mxu0 0
    %129 = vmatpush1.bf16.msra.mxu0 %v110
    %130 = vmatprep.subr.bf16.mxu0 0
    %131 = vmatpush1.bf16.msra.mxu0 %v109
    %132 = vmatprep.subr.bf16.mxu0 0
    %133 = vmatpush1.bf16.msra.mxu0 %v108
    %134 = vmatprep.subr.bf16.mxu0 0
    %135 = vmatpush1.bf16.msra.mxu0 %v107
    %136 = vmatprep.subr.bf16.mxu0 0
    %137 = vmatpush1.bf16.msra.mxu0 %v106
    %138 = vmatprep.subr.bf16.mxu0 0
    %139 = vmatpush2.bf16.msra.mxu0 0
    %140 = vmatprep.subr.bf16.mxu0 0
    %141 = vmatpush2.bf16.msra.mxu0 0
    %142 = vmatprep.subr.bf16.mxu0 0
    %143 = vmatpush2.bf16.msra.mxu0 0
    %144 = vmatprep.subr.bf16.mxu0 0
    %145 = vmatpush2.bf16.msra.mxu0 0
    %146 = vmatprep.subr.bf16.mxu0 0
    %147 = vmatpush2.bf16.msra.mxu0 0
    %148 = vmatprep.subr.bf16.mxu0 0
    %149 = vmatpush2.bf16.msra.mxu0 0
    %150 = vmatprep.subr.bf16.mxu0 0
    %151 = vmatpush2.bf16.msra.mxu0 0
    %152 = vmatprep.subr.bf16.mxu0 0
    %153 = vmatpush2.bf16.msra.mxu0 0
    %154 = vmatprep.mubr.bf16.mxu0 0
    %155 = vmatmul.mubr.bf16.gmra.mxu0 %v50
    %v156 = vpop.f32.mrf.mxu0
    %v157 = vadd.f32 %v72, %v156
    %v158 = vpop.f32.mrf.mxu0
    %v159 = vpop.f32.mrf.mxu0
    %v160 = vpop.f32.mrf.mxu0
    %161 = vdwg.mxu0
    %v162 = vmax.f32 %v157, 0.0
    %v163 = vpack.c.bf16 %v162, %v162
    %v164 = vld [vmem:[#allocation5] sm:$0xf]
    %v165 = vld [vmem:[#allocation5 + $0x4] sm:$0xf]
    %v166 = vld [vmem:[#allocation5 + $0x8] sm:$0xf]
    %v167 = vld [vmem:[#allocation5 + $0xc] sm:$0xf]
    %v168 = vld [vmem:[#allocation5 + $0x10] sm:$0xf]
    %v169 = vld [vmem:[#allocation5 + $0x14] sm:$0xf]
    %v170 = vld [vmem:[#allocation5 + $0x18] sm:$0xf]
    %v171 = vld [vmem:[#allocation5 + $0x1c] sm:$0xf]
    %v172 = vld [vmem:[#allocation5 + $0x20] sm:$0xf]
    %v173 = vld [vmem:[#allocation5 + $0x24] sm:$0xf]
    %v174 = vld [vmem:[#allocation5 + $0x28] sm:$0xf]
    %v175 = vld [vmem:[#allocation5 + $0x2c] sm:$0xf]
    %v176 = vld [vmem:[#allocation5 + $0x30] sm:$0xf]
    %v177 = vld [vmem:[#allocation5 + $0x34] sm:$0xf]
    %v178 = vld [vmem:[#allocation5 + $0x38] sm:$0xf]
    %v179 = vld [vmem:[#allocation5 + $0x3c] sm:$0xf]
    %v180 = vld [vmem:[%s4] sm:$0x1]
    %v182 = vlaneseq
    %v183 = vshrl.u32 %v182, 7
    %v184 = vsub.s32 0, %v183
    %v185 = vrot.slane %v180, %v184
    %v203 = vunpack.c.l.b16 %v164
    %v204 = vunpack.c.l.b16 %v165
    %v205 = vunpack.c.l.b16 %v166
    %v206 = vunpack.c.l.b16 %v167
    %v207 = vunpack.c.l.b16 %v168
    %v208 = vunpack.c.l.b16 %v169
    %v209 = vunpack.c.l.b16 %v170
    %v210 = vunpack.c.l.b16 %v171
    %v211 = vunpack.c.l.b16 %v172
    %v212 = vunpack.c.l.b16 %v173
    %v213 = vunpack.c.l.b16 %v174
    %v214 = vunpack.c.l.b16 %v175
    %v215 = vunpack.c.l.b16 %v176
    %v216 = vunpack.c.l.b16 %v177
    %v217 = vunpack.c.l.b16 %v178
    %v218 = vunpack.c.l.b16 %v179
    %v219 = vpack.c.b16 %v204, %v203
    %v220 = vpack.c.b16 %v206, %v205
    %v221 = vpack.c.b16 %v208, %v207
    %v222 = vpack.c.b16 %v210, %v209
    %v223 = vpack.c.b16 %v212, %v211
    %v224 = vpack.c.b16 %v214, %v213
    %v225 = vpack.c.b16 %v216, %v215
    %v226 = vpack.c.b16 %v218, %v217
    %235 = vmatprep.subr.bf16.mxu0 0
    %236 = vmatpush1.bf16.msra.mxu0 %v226
    %237 = vmatprep.subr.bf16.mxu0 0
    %238 = vmatpush1.bf16.msra.mxu0 %v225
    %239 = vmatprep.subr.bf16.mxu0 0
    %240 = vmatpush1.bf16.msra.mxu0 %v224
    %241 = vmatprep.subr.bf16.mxu0 0
    %242 = vmatpush1.bf16.msra.mxu0 %v223
    %243 = vmatprep.subr.bf16.mxu0 0
    %244 = vmatpush1.bf16.msra.mxu0 %v222
    %245 = vmatprep.subr.bf16.mxu0 0
    %246 = vmatpush1.bf16.msra.mxu0 %v221
    %247 = vmatprep.subr.bf16.mxu0 0
    %248 = vmatpush1.bf16.msra.mxu0 %v220
    %249 = vmatprep.subr.bf16.mxu0 0
    %250 = vmatpush1.bf16.msra.mxu0 %v219
    %251 = vmatprep.subr.bf16.mxu0 0
    %252 = vmatpush2.bf16.msra.mxu0 0
    %253 = vmatprep.subr.bf16.mxu0 0
    %254 = vmatpush2.bf16.msra.mxu0 0
    %255 = vmatprep.subr.bf16.mxu0 0
    %256 = vmatpush2.bf16.msra.mxu0 0
    %257 = vmatprep.subr.bf16.mxu0 0
    %258 = vmatpush2.bf16.msra.mxu0 0
    %259 = vmatprep.subr.bf16.mxu0 0
    %260 = vmatpush2.bf16.msra.mxu0 0
    %261 = vmatprep.subr.bf16.mxu0 0
    %262 = vmatpush2.bf16.msra.mxu0 0
    %263 = vmatprep.subr.bf16.mxu0 0
    %264 = vmatpush2.bf16.msra.mxu0 0
    %265 = vmatprep.subr.bf16.mxu0 0
    %266 = vmatpush2.bf16.msra.mxu0 0
    %267 = vmatprep.mubr.bf16.mxu0 0
    %268 = vmatmul.mubr.bf16.gmra.mxu0 %v163
    %v269 = vpop.f32.mrf.mxu0
    %v270 = vadd.f32 %v185, %v269
    %v271 = vpop.f32.mrf.mxu0
    %v272 = vpop.f32.mrf.mxu0
    %v273 = vpop.f32.mrf.mxu0
    %274 = vdwg.mxu0
    %275 = vmax.xlane.f32.xlu0 %v270
    %v276 = vpop.xlane.xlu0 %275
    %v277 = vsub.f32 %v270, %v276
    %v278 = vmul.f32 %v277, 1.442695
    %v279 = vpow.pop %v278
    %280 = vadd.xlane.f32.xlu0 %v279
    %v281 = vpop.xlane.xlu0 %280
    %v282 = vlog2.pop %v281
    %v283 = vmul.f32 %v282, 0.6931472
    %v284 = vsub.f32 %v277, %v283
    %285 = vst [vmem:[#allocation7] sm:$0xff] %v284
    // Predicated region
    $region30: #{ffnn_forward.1} parent=1 // pred_check
      _
    $region31: #{ffnn_forward.1} parent=1 // pred_check_branch
      %287 = sbr.rel (0) target = $region33
    $region32: #{ffnn_forward.1} parent=1 // pred_region
      %s289 = ssub.s32 128, 128
      %290 = vsyncadd [#allocation4], %s289
      %s292 = sshll.u32 [#allocation7], 4
      %s293 = int_to_ptr.vmem [resolvable:$true] %s292
      %295 = dma.vmem_to_hbm [thread:$0]  %s293, 128, %s5, [#allocation4]
    $region33: #{ffnn_forward.1} parent=1 // pred_fallthru
      _
    // Predicated region
    $region34: #{ffnn_forward.1} parent=1 // pred_check
      _
    $region35: #{ffnn_forward.1} parent=1 // pred_check_branch
      %297 = sbr.rel (0) target = $region37
    $region36: #{ffnn_forward.1} parent=1 // pred_region
      %298 = dma.done [#allocation4], 128
    $region37: #{ffnn_forward.1} parent=1 // pred_fallthru
      _
    %299 = vsyncpa [#allocation3], 1
    %300 = vsyncpa [#allocation6], 1
    %301 = vsyncpa [#allocation4], 1

</llo_original>
